<compile_context>
chip_gen: v7x
topology: tpu7x:2x2x1
jax: 0.10.0
libtpu: 0.0.40
codegen_flags: <defaults>
</compile_context>

<pallas_src>
import jax
import jax.numpy as jnp
import numpy as np
from jax.experimental import pallas as pl
from jax.experimental.pallas import tpu as pltpu

# Tap order i = (dh+1)*3 + (dw+1); centre tap is i == 4.
_TAPS = [(dh, dw) for dh in (-1, 0, 1) for dw in (-1, 0, 1)]


def _boundary_masks(H, W, NB):
    """(9, NB*H*W) f32 0/1 masks reproducing 3x3 'same' zero padding per image.

    The masks also zero every position whose rolled source would wrap across a
    row / image boundary, so rolling the flat (C, NB*HW) axis is exact.
    """
    HW = H * W
    p = np.arange(HW)
    h, w = p // W, p % W
    m = np.zeros((9, HW), np.float32)
    for i, (dh, dw) in enumerate(_TAPS):
        valid = (h + dh >= 0) & (h + dh < H) & (w + dw >= 0) & (w + dw < W)
        m[i, valid] = 1.0
    return jnp.asarray(np.tile(m, (1, NB)))               # (9, NB*HW)


def _make_kernel(negative_slope, use_projection, Cin, Cout, W, L):
    # shifted[p] = x[p + dh*W + dw]  ==  roll(x, -(dh*W+dw) mod L) (then masked)
    shifts = [(-(dh * W + dw)) % L for (dh, dw) in _TAPS]

    def lrelu(v):
        return jnp.where(v > 0, v, negative_slope * v)

    def im2col(a, c, mask_ref, col_ref):
        # a: (c, L) f32. 9 taps = XLU lane-rolls + VPU boundary masks, stacked
        # into the (9*c, L) f32 scratch with lane-dense static-slice stores.
        for i, sh in enumerate(shifts):
            if sh == 0:                                    # centre tap: mask == 1
                tap = a
            else:
                tap = pltpu.roll(a, sh, 1) * mask_ref[pl.ds(i, 1), :]
            col_ref[pl.ds(i * c, c), :] = tap

    def kernel(x_ref, w1_ref, w2_ref, mask_ref, o_ref, col1_ref, col2_ref, *r_scr):
        x = x_ref[...].astype(jnp.float32)                 # (Cin, L), lane-dense
        # conv1 (+ folded 1x1 projection): single bf16 MXU matmul, K = 9*Cin.
        im2col(x, Cin, mask_ref, col1_ref)
        r = jnp.dot(w1_ref[...], col1_ref[...].astype(jnp.bfloat16),
                    preferred_element_type=jnp.float32)
        if use_projection:
            (r_ref,) = r_scr
            r_ref[...] = r                                 # (2*Cout, L) f32
            y1 = lrelu(r_ref[pl.ds(0, Cout), :])           # conv1 + LeakyReLU
            res = r_ref[pl.ds(Cout, Cout), :]              # 1x1 projection (skip)
        else:
            y1 = lrelu(r)                                  # conv1 + LeakyReLU
            res = x                                        # identity skip (Cin==Cout)
        # conv2: single bf16 MXU matmul, K = 9*Cout.
        im2col(y1, Cout, mask_ref, col2_ref)
        y2 = jnp.dot(w2_ref[...], col2_ref[...].astype(jnp.bfloat16),
                     preferred_element_type=jnp.float32)
        o_ref[...] = lrelu(y2 + res).astype(o_ref.dtype)   # fused add + act

    return kernel


def resnet_block_forward(x, w1, w2, w_proj=None, negative_slope=0.1):
    """ResNetBlock forward for the default stride=1 config.

    x:      (N, Cin, H, W)  float32, NCHW (PyTorch layout)
    w1:     (Cout, Cin, 3, 3)   conv1 weight (bias=False)
    w2:     (Cout, Cout, 3, 3)  conv2 weight (bias=False)
    w_proj: (Cout, Cin, 1, 1)   1x1 projection weight, or None if Cin == Cout
    returns (N, Cout, H, W)
    """
    N, Cin, H, W = x.shape
    Cout = w1.shape[0]
    HW = H * W
    use_projection = w_proj is not None
    assert HW % 128 == 0, "H*W must be a multiple of 128 for the lane-dense layout"
    # TODO(synk): stride != 1 (downsampling variant) and the BatchNorm/
    # InstanceNorm branches (off by default in the module) are not implemented.

    # Batch folding: G grid steps (2 when the batch is even so both v7x
    # TensorCores get work), each step handling NB images on the lane axis.
    G = 2 if (N % 2 == 0 and N >= 2) else 1
    NB = N // G
    L = NB * HW

    # Cheap wrapper-side relayout of a tiny tensor: (N,C,H,W) -> (G, C, NB*HW).
    x_g = jnp.transpose(x.reshape(G, NB, Cin, HW), (0, 2, 1, 3)).reshape(G, Cin, L)

    # Host-side im2col weight packing: (Cout, 9*C) LHS per conv; the 1x1
    # projection is zero-padded into the centre-tap columns and stacked under
    # w1 so the residual comes out of the same MXU matmul.
    w1_mat = jnp.transpose(w1, (0, 2, 3, 1)).reshape(Cout, 9 * Cin)
    w2_mat = jnp.transpose(w2, (0, 2, 3, 1)).reshape(Cout, 9 * Cout).astype(jnp.bfloat16)
    if use_projection:
        wp = w_proj.reshape(Cout, Cin)
        wp_mat = jnp.zeros((Cout, 9 * Cin), w1_mat.dtype).at[:, 4 * Cin:5 * Cin].set(wp)
        w1_mat = jnp.concatenate([w1_mat, wp_mat], axis=0)       # (2*Cout, 9*Cin)
    w1_mat = w1_mat.astype(jnp.bfloat16)

    masks = _boundary_masks(H, W, NB)                            # (9, L) f32, tiny

    kernel = _make_kernel(negative_slope, use_projection, Cin, Cout, W, L)

    in_specs = [
        pl.BlockSpec((None, Cin, L), lambda g: (g, 0, 0)),       # one batch group/step
        pl.BlockSpec(w1_mat.shape, lambda g: (0, 0)),            # resident bf16 weights
        pl.BlockSpec(w2_mat.shape, lambda g: (0, 0)),            # resident bf16 weights
        pl.BlockSpec((9, L), lambda g: (0, 0)),                  # boundary masks
    ]
    scratch_shapes = [
        pltpu.VMEM((9 * Cin, L), jnp.float32),                   # im2col of x
        pltpu.VMEM((9 * Cout, L), jnp.float32),                  # im2col of lrelu(conv1)
    ]
    if use_projection:
        scratch_shapes.append(pltpu.VMEM((2 * Cout, L), jnp.float32))

    flops = 2 * N * HW * (int(w1_mat.shape[0]) * 9 * Cin + Cout * 9 * Cout)
    bytes_accessed = (x_g.size * 4 + G * Cout * L * 4
                      + w1_mat.size * 2 + w2_mat.size * 2 + masks.size * 4)

    out = pl.pallas_call(
        kernel,
        out_shape=jax.ShapeDtypeStruct((G, Cout, L), x.dtype),
        grid_spec=pltpu.PrefetchScalarGridSpec(
            num_scalar_prefetch=0,
            grid=(G,),
            in_specs=in_specs,
            out_specs=pl.BlockSpec((None, Cout, L), lambda g: (g, 0, 0)),
            scratch_shapes=scratch_shapes,
        ),
        compiler_params=pltpu.CompilerParams(
            dimension_semantics=("parallel",),
            vmem_limit_bytes=8 * 1024 * 1024,
        ),
        cost_estimate=pl.CostEstimate(
            flops=flops, transcendentals=0, bytes_accessed=int(bytes_accessed)),
    )(x_g, w1_mat, w2_mat, masks)

    return jnp.transpose(out.reshape(G, Cout, NB, HW),
                         (0, 2, 1, 3)).reshape(N, Cout, H, W)


def _reference(x, w1, w2, w_proj, negative_slope=0.1):
    """XLA reference for the same ResNetBlock forward."""
    dn = ("NCHW", "OIHW", "NCHW")
    lrelu = lambda v: jnp.where(v > 0, v, negative_slope * v)
    y = jax.lax.conv_general_dilated(x, w1, (1, 1), ((1, 1), (1, 1)),
                                     dimension_numbers=dn)
    y = lrelu(y)
    y = jax.lax.conv_general_dilated(y, w2, (1, 1), ((1, 1), (1, 1)),
                                     dimension_numbers=dn)
    if w_proj is not None:
        res = jax.lax.conv_general_dilated(x, w_proj, (1, 1), ((0, 0), (0, 0)),
                                           dimension_numbers=dn)
    else:
        res = x
    return lrelu(y + res)


if __name__ == "__main__":
    key = jax.random.PRNGKey(0)
    kx, k1, k2, kp = jax.random.split(key, 4)

    # ResNetBlock(in_channels=4, out_channels=8, stride=1): projection branch
    # is exercised because Cin != Cout.
    N, Cin, Cout, H, W = 2, 4, 8, 16, 16
    x = jax.random.normal(kx, (N, Cin, H, W), dtype=jnp.float32)

    def _uniform_weight(k, shape, fan_in):
        bound = float(np.sqrt(1.0 / fan_in))   # kaiming_uniform-ish scale
        return jax.random.uniform(k, shape, jnp.float32,
                                  minval=-bound, maxval=bound)

    w1 = _uniform_weight(k1, (Cout, Cin, 3, 3), Cin * 9)
    w2 = _uniform_weight(k2, (Cout, Cout, 3, 3), Cout * 9)
    w_proj = _uniform_weight(kp, (Cout, Cin, 1, 1), Cin)

    fwd = jax.jit(resnet_block_forward)
    out = jax.block_until_ready(fwd(x, w1, w2, w_proj))
    assert out.shape == (N, Cout, H, W), out.shape

    ref = jax.block_until_ready(_reference(x, w1, w2, w_proj))
    max_err = float(jnp.max(jnp.abs(out - ref)))
    # bf16 MXU operands (f32 accumulation): expect ~1e-2 absolute error at
    # these O(1) activation scales; structural bugs would show up as O(1).
    assert max_err < 1.5e-1, f"mismatch: {max_err}"

    print("KERNEL_OK")
</pallas_src>

<mosaic_0001>
module attributes {stable_mosaic.version = 11 : i64} {
  func.func @kernel(%arg0: i32, %arg1: memref<1x4x256xf32, #tpu.memory_space<vmem>>, %arg2: memref<16x36xbf16, #tpu.memory_space<vmem>>, %arg3: memref<8x72xbf16, #tpu.memory_space<vmem>>, %arg4: memref<9x256xf32, #tpu.memory_space<vmem>>, %arg5: memref<1x8x256xf32, #tpu.memory_space<vmem>>, %arg6: memref<36x256xf32, #tpu.memory_space<vmem>>, %arg7: memref<72x256xf32, #tpu.memory_space<vmem>>, %arg8: memref<16x256xf32, #tpu.memory_space<vmem>>) attributes {dimension_semantics = [#tpu.dimension_semantics<parallel>], iteration_bounds = array<i64: 2>, scalar_prefetch = 0 : i64, scratch_operands = 3 : i64, tpu.core_type = #tpu.core_type<tc>, window_params = [{transform_indices = @transform_0, window_bounds = array<i64: 1, 4, 256>}, {pipeline_mode = #tpu.pipeline_mode<synchronous>, transform_indices = @transform_1, window_bounds = array<i64: 16, 36>}, {pipeline_mode = #tpu.pipeline_mode<synchronous>, transform_indices = @transform_2, window_bounds = array<i64: 8, 72>}, {pipeline_mode = #tpu.pipeline_mode<synchronous>, transform_indices = @transform_3, window_bounds = array<i64: 9, 256>}, {transform_indices = @transform_4, window_bounds = array<i64: 1, 8, 256>}]} {
    %c0 = arith.constant 0 : index
    %c0_0 = arith.constant 0 : index
    %c0_1 = arith.constant 0 : index
    %0 = vector.load %arg1[%c0, %c0_0, %c0_1] : memref<1x4x256xf32, #tpu.memory_space<vmem>>, vector<1x4x256xf32>
    %1 = vector.shape_cast %0 : vector<1x4x256xf32> to vector<4x256xf32>
    %c17_i32 = arith.constant 17 : i32
    %2 = tpu.dynamic_rotate %1 by %c17_i32 dim 1 : vector<4x256xf32>, i32 -> vector<4x256xf32>
    %c0_2 = arith.constant 0 : index
    %c0_3 = arith.constant 0 : index
    %3 = vector.load %arg4[%c0_2, %c0_3] : memref<9x256xf32, #tpu.memory_space<vmem>>, vector<1x256xf32>
    %4 = vector.broadcast %3 : vector<1x256xf32> to vector<4x256xf32>
    %5 = arith.mulf %2, %4 : vector<4x256xf32>
    %c0_4 = arith.constant 0 : index
    %c0_5 = arith.constant 0 : index
    %6 = vector.load %arg6[%c0_4, %c0_5] : memref<36x256xf32, #tpu.memory_space<vmem>>, vector<4x256xf32>
    tpu.vector_store %arg6[%c0_4, %c0_5], %5 {strides = array<i32>} : memref<36x256xf32, #tpu.memory_space<vmem>>, vector<4x256xf32>,
    %c16_i32 = arith.constant 16 : i32
    %7 = tpu.dynamic_rotate %1 by %c16_i32 dim 1 : vector<4x256xf32>, i32 -> vector<4x256xf32>
    %c1 = arith.constant 1 : index
    %c0_6 = arith.constant 0 : index
    %8 = vector.load %arg4[%c1, %c0_6] : memref<9x256xf32, #tpu.memory_space<vmem>>, vector<1x256xf32>
    %9 = vector.broadcast %8 : vector<1x256xf32> to vector<4x256xf32>
    %10 = arith.mulf %7, %9 : vector<4x256xf32>
    %c4 = arith.constant 4 : index
    %c0_7 = arith.constant 0 : index
    %11 = vector.load %arg6[%c4, %c0_7] : memref<36x256xf32, #tpu.memory_space<vmem>>, vector<4x256xf32>
    tpu.vector_store %arg6[%c4, %c0_7], %10 {strides = array<i32>} : memref<36x256xf32, #tpu.memory_space<vmem>>, vector<4x256xf32>,
    %c15_i32 = arith.constant 15 : i32
    %12 = tpu.dynamic_rotate %1 by %c15_i32 dim 1 : vector<4x256xf32>, i32 -> vector<4x256xf32>
    %c2 = arith.constant 2 : index
    %c0_8 = arith.constant 0 : index
    %13 = vector.load %arg4[%c2, %c0_8] : memref<9x256xf32, #tpu.memory_space<vmem>>, vector<1x256xf32>
    %14 = vector.broadcast %13 : vector<1x256xf32> to vector<4x256xf32>
    %15 = arith.mulf %12, %14 : vector<4x256xf32>
    %c8 = arith.constant 8 : index
    %c0_9 = arith.constant 0 : index
    %16 = vector.load %arg6[%c8, %c0_9] : memref<36x256xf32, #tpu.memory_space<vmem>>, vector<4x256xf32>
    tpu.vector_store %arg6[%c8, %c0_9], %15 {strides = array<i32>} : memref<36x256xf32, #tpu.memory_space<vmem>>, vector<4x256xf32>,
    %c1_i32 = arith.constant 1 : i32
    %17 = tpu.dynamic_rotate %1 by %c1_i32 dim 1 : vector<4x256xf32>, i32 -> vector<4x256xf32>
    %c3 = arith.constant 3 : index
    %c0_10 = arith.constant 0 : index
    %18 = vector.load %arg4[%c3, %c0_10] : memref<9x256xf32, #tpu.memory_space<vmem>>, vector<1x256xf32>
    %19 = vector.broadcast %18 : vector<1x256xf32> to vector<4x256xf32>
    %20 = arith.mulf %17, %19 : vector<4x256xf32>
    %c12 = arith.constant 12 : index
    %c0_11 = arith.constant 0 : index
    %21 = vector.load %arg6[%c12, %c0_11] : memref<36x256xf32, #tpu.memory_space<vmem>>, vector<4x256xf32>
    tpu.vector_store %arg6[%c12, %c0_11], %20 {strides = array<i32>} : memref<36x256xf32, #tpu.memory_space<vmem>>, vector<4x256xf32>,
    %c16 = arith.constant 16 : index
    %c0_12 = arith.constant 0 : index
    %22 = vector.load %arg6[%c16, %c0_12] : memref<36x256xf32, #tpu.memory_space<vmem>>, vector<4x256xf32>
    tpu.vector_store %arg6[%c16, %c0_12], %1 {strides = array<i32>} : memref<36x256xf32, #tpu.memory_space<vmem>>, vector<4x256xf32>,
    %c255_i32 = arith.constant 255 : i32
    %23 = tpu.dynamic_rotate %1 by %c255_i32 dim 1 : vector<4x256xf32>, i32 -> vector<4x256xf32>
    %c5 = arith.constant 5 : index
    %c0_13 = arith.constant 0 : index
    %24 = vector.load %arg4[%c5, %c0_13] : memref<9x256xf32, #tpu.memory_space<vmem>>, vector<1x256xf32>
    %25 = vector.broadcast %24 : vector<1x256xf32> to vector<4x256xf32>
    %26 = arith.mulf %23, %25 : vector<4x256xf32>
    %c20 = arith.constant 20 : index
    %c0_14 = arith.constant 0 : index
    %27 = vector.load %arg6[%c20, %c0_14] : memref<36x256xf32, #tpu.memory_space<vmem>>, vector<4x256xf32>
    tpu.vector_store %arg6[%c20, %c0_14], %26 {strides = array<i32>} : memref<36x256xf32, #tpu.memory_space<vmem>>, vector<4x256xf32>,
    %c241_i32 = arith.constant 241 : i32
    %28 = tpu.dynamic_rotate %1 by %c241_i32 dim 1 : vector<4x256xf32>, i32 -> vector<4x256xf32>
    %c6 = arith.constant 6 : index
    %c0_15 = arith.constant 0 : index
    %29 = vector.load %arg4[%c6, %c0_15] : memref<9x256xf32, #tpu.memory_space<vmem>>, vector<1x256xf32>
    %30 = vector.broadcast %29 : vector<1x256xf32> to vector<4x256xf32>
    %31 = arith.mulf %28, %30 : vector<4x256xf32>
    %c24 = arith.constant 24 : index
    %c0_16 = arith.constant 0 : index
    %32 = vector.load %arg6[%c24, %c0_16] : memref<36x256xf32, #tpu.memory_space<vmem>>, vector<4x256xf32>
    tpu.vector_store %arg6[%c24, %c0_16], %31 {strides = array<i32>} : memref<36x256xf32, #tpu.memory_space<vmem>>, vector<4x256xf32>,
    %c240_i32 = arith.constant 240 : i32
    %33 = tpu.dynamic_rotate %1 by %c240_i32 dim 1 : vector<4x256xf32>, i32 -> vector<4x256xf32>
    %c7 = arith.constant 7 : index
    %c0_17 = arith.constant 0 : index
    %34 = vector.load %arg4[%c7, %c0_17] : memref<9x256xf32, #tpu.memory_space<vmem>>, vector<1x256xf32>
    %35 = vector.broadcast %34 : vector<1x256xf32> to vector<4x256xf32>
    %36 = arith.mulf %33, %35 : vector<4x256xf32>
    %c28 = arith.constant 28 : index
    %c0_18 = arith.constant 0 : index
    %37 = vector.load %arg6[%c28, %c0_18] : memref<36x256xf32, #tpu.memory_space<vmem>>, vector<4x256xf32>
    tpu.vector_store %arg6[%c28, %c0_18], %36 {strides = array<i32>} : memref<36x256xf32, #tpu.memory_space<vmem>>, vector<4x256xf32>,
    %c239_i32 = arith.constant 239 : i32
    %38 = tpu.dynamic_rotate %1 by %c239_i32 dim 1 : vector<4x256xf32>, i32 -> vector<4x256xf32>
    %c8_19 = arith.constant 8 : index
    %c0_20 = arith.constant 0 : index
    %39 = vector.load %arg4[%c8_19, %c0_20] : memref<9x256xf32, #tpu.memory_space<vmem>>, vector<1x256xf32>
    %40 = vector.broadcast %39 : vector<1x256xf32> to vector<4x256xf32>
    %41 = arith.mulf %38, %40 : vector<4x256xf32>
    %c32 = arith.constant 32 : index
    %c0_21 = arith.constant 0 : index
    %42 = vector.load %arg6[%c32, %c0_21] : memref<36x256xf32, #tpu.memory_space<vmem>>, vector<4x256xf32>
    tpu.vector_store %arg6[%c32, %c0_21], %41 {strides = array<i32>} : memref<36x256xf32, #tpu.memory_space<vmem>>, vector<4x256xf32>,
    %c0_22 = arith.constant 0 : index
    %c0_23 = arith.constant 0 : index
    %43 = vector.load %arg2[%c0_22, %c0_23] : memref<16x36xbf16, #tpu.memory_space<vmem>>, vector<16x36xbf16>
    %c0_24 = arith.constant 0 : index
    %c0_25 = arith.constant 0 : index
    %44 = vector.load %arg6[%c0_24, %c0_25] : memref<36x256xf32, #tpu.memory_space<vmem>>, vector<36x256xf32>
    %45 = arith.truncf %44 : vector<36x256xf32> to vector<36x256xbf16>
    %cst = arith.constant dense<0.000000e+00> : vector<16x256xf32>
    %46 = tpu.matmul %43, %45, %cst {dimension_numbers = #tpu.dot_dimension_numbers<[1], [0], [0], [1], [0, 0, 1, 1], [], []>} : vector<16x36xbf16>, vector<36x256xbf16>, vector<16x256xf32> -> vector<16x256xf32>
    %c0_26 = arith.constant 0 : index
    %c0_27 = arith.constant 0 : index
    %47 = vector.load %arg8[%c0_26, %c0_27] : memref<16x256xf32, #tpu.memory_space<vmem>>, vector<16x256xf32>
    tpu.vector_store %arg8[%c0_26, %c0_27], %46 {strides = array<i32>} : memref<16x256xf32, #tpu.memory_space<vmem>>, vector<16x256xf32>,
    %c0_28 = arith.constant 0 : index
    %c0_29 = arith.constant 0 : index
    %48 = vector.load %arg8[%c0_28, %c0_29] : memref<16x256xf32, #tpu.memory_space<vmem>>, vector<8x256xf32>
    %cst_30 = arith.constant 0.000000e+00 : f32
    %49 = vector.broadcast %cst_30 : f32 to vector<8x256xf32>
    %50 = arith.cmpf ogt, %48, %49 : vector<8x256xf32>
    %cst_31 = arith.constant 1.000000e-01 : f32
    %51 = vector.broadcast %cst_31 : f32 to vector<8x256xf32>
    %52 = arith.mulf %51, %48 : vector<8x256xf32>
    %53 = arith.select %50, %48, %52 : vector<8x256xi1>, vector<8x256xf32>
    %c8_32 = arith.constant 8 : index
    %c0_33 = arith.constant 0 : index
    %54 = vector.load %arg8[%c8_32, %c0_33] : memref<16x256xf32, #tpu.memory_space<vmem>>, vector<8x256xf32>
    %c17_i32_34 = arith.constant 17 : i32
    %55 = tpu.dynamic_rotate %53 by %c17_i32_34 dim 1 : vector<8x256xf32>, i32 -> vector<8x256xf32>
    %c0_35 = arith.constant 0 : index
    %c0_36 = arith.constant 0 : index
    %56 = vector.load %arg4[%c0_35, %c0_36] : memref<9x256xf32, #tpu.memory_space<vmem>>, vector<1x256xf32>
    %57 = vector.broadcast %56 : vector<1x256xf32> to vector<8x256xf32>
    %58 = arith.mulf %55, %57 : vector<8x256xf32>
    %c0_37 = arith.constant 0 : index
    %c0_38 = arith.constant 0 : index
    %59 = vector.load %arg7[%c0_37, %c0_38] : memref<72x256xf32, #tpu.memory_space<vmem>>, vector<8x256xf32>
    tpu.vector_store %arg7[%c0_37, %c0_38], %58 {strides = array<i32>} : memref<72x256xf32, #tpu.memory_space<vmem>>, vector<8x256xf32>,
    %c16_i32_39 = arith.constant 16 : i32
    %60 = tpu.dynamic_rotate %53 by %c16_i32_39 dim 1 : vector<8x256xf32>, i32 -> vector<8x256xf32>
    %c1_40 = arith.constant 1 : index
    %c0_41 = arith.constant 0 : index
    %61 = vector.load %arg4[%c1_40, %c0_41] : memref<9x256xf32, #tpu.memory_space<vmem>>, vector<1x256xf32>
    %62 = vector.broadcast %61 : vector<1x256xf32> to vector<8x256xf32>
    %63 = arith.mulf %60, %62 : vector<8x256xf32>
    %c8_42 = arith.constant 8 : index
    %c0_43 = arith.constant 0 : index
    %64 = vector.load %arg7[%c8_42, %c0_43] : memref<72x256xf32, #tpu.memory_space<vmem>>, vector<8x256xf32>
    tpu.vector_store %arg7[%c8_42, %c0_43], %63 {strides = array<i32>} : memref<72x256xf32, #tpu.memory_space<vmem>>, vector<8x256xf32>,
    %c15_i32_44 = arith.constant 15 : i32
    %65 = tpu.dynamic_rotate %53 by %c15_i32_44 dim 1 : vector<8x256xf32>, i32 -> vector<8x256xf32>
    %c2_45 = arith.constant 2 : index
    %c0_46 = arith.constant 0 : index
    %66 = vector.load %arg4[%c2_45, %c0_46] : memref<9x256xf32, #tpu.memory_space<vmem>>, vector<1x256xf32>
    %67 = vector.broadcast %66 : vector<1x256xf32> to vector<8x256xf32>
    %68 = arith.mulf %65, %67 : vector<8x256xf32>
    %c16_47 = arith.constant 16 : index
    %c0_48 = arith.constant 0 : index
    %69 = vector.load %arg7[%c16_47, %c0_48] : memref<72x256xf32, #tpu.memory_space<vmem>>, vector<8x256xf32>
    tpu.vector_store %arg7[%c16_47, %c0_48], %68 {strides = array<i32>} : memref<72x256xf32, #tpu.memory_space<vmem>>, vector<8x256xf32>,
    %c1_i32_49 = arith.constant 1 : i32
    %70 = tpu.dynamic_rotate %53 by %c1_i32_49 dim 1 : vector<8x256xf32>, i32 -> vector<8x256xf32>
    %c3_50 = arith.constant 3 : index
    %c0_51 = arith.constant 0 : index
    %71 = vector.load %arg4[%c3_50, %c0_51] : memref<9x256xf32, #tpu.memory_space<vmem>>, vector<1x256xf32>
    %72 = vector.broadcast %71 : vector<1x256xf32> to vector<8x256xf32>
    %73 = arith.mulf %70, %72 : vector<8x256xf32>
    %c24_52 = arith.constant 24 : index
    %c0_53 = arith.constant 0 : index
    %74 = vector.load %arg7[%c24_52, %c0_53] : memref<72x256xf32, #tpu.memory_space<vmem>>, vector<8x256xf32>
    tpu.vector_store %arg7[%c24_52, %c0_53], %73 {strides = array<i32>} : memref<72x256xf32, #tpu.memory_space<vmem>>, vector<8x256xf32>,
    %c32_54 = arith.constant 32 : index
    %c0_55 = arith.constant 0 : index
    %75 = vector.load %arg7[%c32_54, %c0_55] : memref<72x256xf32, #tpu.memory_space<vmem>>, vector<8x256xf32>
    tpu.vector_store %arg7[%c32_54, %c0_55], %53 {strides = array<i32>} : memref<72x256xf32, #tpu.memory_space<vmem>>, vector<8x256xf32>,
    %c255_i32_56 = arith.constant 255 : i32
    %76 = tpu.dynamic_rotate %53 by %c255_i32_56 dim 1 : vector<8x256xf32>, i32 -> vector<8x256xf32>
    %c5_57 = arith.constant 5 : index
    %c0_58 = arith.constant 0 : index
    %77 = vector.load %arg4[%c5_57, %c0_58] : memref<9x256xf32, #tpu.memory_space<vmem>>, vector<1x256xf32>
    %78 = vector.broadcast %77 : vector<1x256xf32> to vector<8x256xf32>
    %79 = arith.mulf %76, %78 : vector<8x256xf32>
    %c40 = arith.constant 40 : index
    %c0_59 = arith.constant 0 : index
    %80 = vector.load %arg7[%c40, %c0_59] : memref<72x256xf32, #tpu.memory_space<vmem>>, vector<8x256xf32>
    tpu.vector_store %arg7[%c40, %c0_59], %79 {strides = array<i32>} : memref<72x256xf32, #tpu.memory_space<vmem>>, vector<8x256xf32>,
    %c241_i32_60 = arith.constant 241 : i32
    %81 = tpu.dynamic_rotate %53 by %c241_i32_60 dim 1 : vector<8x256xf32>, i32 -> vector<8x256xf32>
    %c6_61 = arith.constant 6 : index
    %c0_62 = arith.constant 0 : index
    %82 = vector.load %arg4[%c6_61, %c0_62] : memref<9x256xf32, #tpu.memory_space<vmem>>, vector<1x256xf32>
    %83 = vector.broadcast %82 : vector<1x256xf32> to vector<8x256xf32>
    %84 = arith.mulf %81, %83 : vector<8x256xf32>
    %c48 = arith.constant 48 : index
    %c0_63 = arith.constant 0 : index
    %85 = vector.load %arg7[%c48, %c0_63] : memref<72x256xf32, #tpu.memory_space<vmem>>, vector<8x256xf32>
    tpu.vector_store %arg7[%c48, %c0_63], %84 {strides = array<i32>} : memref<72x256xf32, #tpu.memory_space<vmem>>, vector<8x256xf32>,
    %c240_i32_64 = arith.constant 240 : i32
    %86 = tpu.dynamic_rotate %53 by %c240_i32_64 dim 1 : vector<8x256xf32>, i32 -> vector<8x256xf32>
    %c7_65 = arith.constant 7 : index
    %c0_66 = arith.constant 0 : index
    %87 = vector.load %arg4[%c7_65, %c0_66] : memref<9x256xf32, #tpu.memory_space<vmem>>, vector<1x256xf32>
    %88 = vector.broadcast %87 : vector<1x256xf32> to vector<8x256xf32>
    %89 = arith.mulf %86, %88 : vector<8x256xf32>
    %c56 = arith.constant 56 : index
    %c0_67 = arith.constant 0 : index
    %90 = vector.load %arg7[%c56, %c0_67] : memref<72x256xf32, #tpu.memory_space<vmem>>, vector<8x256xf32>
    tpu.vector_store %arg7[%c56, %c0_67], %89 {strides = array<i32>} : memref<72x256xf32, #tpu.memory_space<vmem>>, vector<8x256xf32>,
    %c239_i32_68 = arith.constant 239 : i32
    %91 = tpu.dynamic_rotate %53 by %c239_i32_68 dim 1 : vector<8x256xf32>, i32 -> vector<8x256xf32>
    %c8_69 = arith.constant 8 : index
    %c0_70 = arith.constant 0 : index
    %92 = vector.load %arg4[%c8_69, %c0_70] : memref<9x256xf32, #tpu.memory_space<vmem>>, vector<1x256xf32>
    %93 = vector.broadcast %92 : vector<1x256xf32> to vector<8x256xf32>
    %94 = arith.mulf %91, %93 : vector<8x256xf32>
    %c64 = arith.constant 64 : index
    %c0_71 = arith.constant 0 : index
    %95 = vector.load %arg7[%c64, %c0_71] : memref<72x256xf32, #tpu.memory_space<vmem>>, vector<8x256xf32>
    tpu.vector_store %arg7[%c64, %c0_71], %94 {strides = array<i32>} : memref<72x256xf32, #tpu.memory_space<vmem>>, vector<8x256xf32>,
    %c0_72 = arith.constant 0 : index
    %c0_73 = arith.constant 0 : index
    %96 = vector.load %arg3[%c0_72, %c0_73] : memref<8x72xbf16, #tpu.memory_space<vmem>>, vector<8x72xbf16>
    %c0_74 = arith.constant 0 : index
    %c0_75 = arith.constant 0 : index
    %97 = vector.load %arg7[%c0_74, %c0_75] : memref<72x256xf32, #tpu.memory_space<vmem>>, vector<72x256xf32>
    %98 = arith.truncf %97 : vector<72x256xf32> to vector<72x256xbf16>
    %cst_76 = arith.constant dense<0.000000e+00> : vector<8x256xf32>
    %99 = tpu.matmul %96, %98, %cst_76 {dimension_numbers = #tpu.dot_dimension_numbers<[1], [0], [0], [1], [0, 0, 1, 1], [], []>} : vector<8x72xbf16>, vector<72x256xbf16>, vector<8x256xf32> -> vector<8x256xf32>
    %100 = arith.addf %99, %54 : vector<8x256xf32>
    %cst_77 = arith.constant 0.000000e+00 : f32
    %101 = vector.broadcast %cst_77 : f32 to vector<8x256xf32>
    %102 = arith.cmpf ogt, %100, %101 : vector<8x256xf32>
    %cst_78 = arith.constant 1.000000e-01 : f32
    %103 = vector.broadcast %cst_78 : f32 to vector<8x256xf32>
    %104 = arith.mulf %103, %100 : vector<8x256xf32>
    %105 = arith.select %102, %100, %104 : vector<8x256xi1>, vector<8x256xf32>
    %c0_79 = arith.constant 0 : index
    %c0_80 = arith.constant 0 : index
    %c0_81 = arith.constant 0 : index
    %106 = vector.load %arg5[%c0_79, %c0_80, %c0_81] : memref<1x8x256xf32, #tpu.memory_space<vmem>>, vector<1x8x256xf32>
    %107 = vector.shape_cast %106 : vector<1x8x256xf32> to vector<8x256xf32>
    %108 = vector.shape_cast %105 : vector<8x256xf32> to vector<1x8x256xf32>
    tpu.vector_store %arg5[%c0_79, %c0_80, %c0_81], %108 {strides = array<i32>} : memref<1x8x256xf32, #tpu.memory_space<vmem>>, vector<1x8x256xf32>,
    return
  }
  func.func @transform_0(%arg0: i32) -> (i32, i32, i32) {
    %c0_i32 = arith.constant 0 : i32
    %c0_i32_0 = arith.constant 0 : i32
    %c0_i32_1 = arith.constant 0 : i32
    return %arg0, %c0_i32, %c0_i32_0 : i32, i32, i32
  }
  func.func @transform_1(%arg0: i32) -> (i32, i32) {
    %c0_i32 = arith.constant 0 : i32
    %c0_i32_0 = arith.constant 0 : i32
    %c0_i32_1 = arith.constant 0 : i32
    return %c0_i32, %c0_i32_0 : i32, i32
  }
  func.func @transform_2(%arg0: i32) -> (i32, i32) {
    %c0_i32 = arith.constant 0 : i32
    %c0_i32_0 = arith.constant 0 : i32
    %c0_i32_1 = arith.constant 0 : i32
    return %c0_i32, %c0_i32_0 : i32, i32
  }
  func.func @transform_3(%arg0: i32) -> (i32, i32) {
    %c0_i32 = arith.constant 0 : i32
    %c0_i32_0 = arith.constant 0 : i32
    %c0_i32_1 = arith.constant 0 : i32
    return %c0_i32, %c0_i32_0 : i32, i32
  }
  func.func @transform_4(%arg0: i32) -> (i32, i32, i32) {
    %c0_i32 = arith.constant 0 : i32
    %c0_i32_0 = arith.constant 0 : i32
    %c0_i32_1 = arith.constant 0 : i32
    return %arg0, %c0_i32, %c0_i32_0 : i32, i32, i32
  }
}

</mosaic_0001>

<llo_original>
// kernel: resnet_block_forward.1
$region0: #{resnet_block_forward.1}
  #allocation0 [shape = 'u32[]', space=smem, size = 0x4, offset = 0x4, fixed_abs, tag = 'smem constant byte address 0x4 - core index']
  #allocation1 [shape = 'u32[144,128]{1,0:T(1,128)}', space=vmem, size = 0x12000, scoped, tag = 'internal scratch']
  #allocation2 [shape = 'f32[36,256]{1,0:T(8,128)}', space=vmem, size = 0xa000, scoped, tag = 'scratch operand']
  #allocation3 [shape = 'f32[72,256]{1,0:T(8,128)}', space=vmem, size = 0x12000, scoped, tag = 'scratch operand']
  #allocation4 [shape = 'f32[16,256]{1,0:T(8,128)}', space=vmem, size = 0x4000, scoped, tag = 'scratch operand']
  %s0 = inlined_call_operand.vmem [shape: f32[2,4,256], index: 0, kind: input, shape index: {}]
  %s1 = inlined_call_operand.vmem [shape: bf16[16,36], index: 1, kind: input, shape index: {}]
  %s2 = inlined_call_operand.vmem [shape: bf16[8,72], index: 2, kind: input, shape index: {}]
  %s3 = inlined_call_operand.vmem [shape: f32[9,256], index: 3, kind: input, shape index: {}]
  %s4 = inlined_call_operand.vmem [shape: f32[2,8,256], index: 4, kind: output, shape index: {}]
  %s5 = sld [smem:[#allocation0]]
  $region49: #{resnet_block_forward.1} parent=0
    _
  %s7 = ssub.s32 1, %s5
  %s8 = scalar_select 0, %s7, %s5
  loop: start=0, step=1, limit=4
  $region2: #{resnet_block_forward.1} parent=0 // loop_pre_header
    _
  $region3: #{resnet_block_forward.1} parent=0 // loop_header
    %s10 = sphi 0, %s14
    %p11 = scmp.ge.s32.totalorder %s10, 4
    %s20 = sphi 0, %s22
    %s23 = sphi 0, %s20
    %s24 = sphi 0, %s23
    %s40 = sphi 0, %s24
    %s44 = sphi 0, %s44
    %s46 = sphi 0, %s44
    %s47 = sphi 0, %s46
    %s61 = sphi 0, %s47
    %s65 = sphi 0, %s65
    %s67 = sphi 0, %s65
    %s68 = sphi 0, %s67
    %s82 = sphi 0, %s68
    %s86 = sphi 0, %s86
    %s88 = sphi 0, %s86
    %s89 = sphi 0, %s88
    %s103 = sphi 0, %s89
    %s109 = sphi 0, %s111
    %s112 = sphi 0, %s109
    %s113 = sphi 0, %s112
    %s129 = sphi 0, %s113
  $region4: #{resnet_block_forward.1} parent=0 // loop_header_branch
    %13 = sbr.rel (%p11) target = $region8
  $region5: #{resnet_block_forward.1} parent=0 // loop_body
    %s15 = ssub.s32 %s10, 1
    %s16 = ssub.s32 %s10, 2
    %s17 = sadd.s32 %s10, 1
    %s18 = ssub.s32 %s10, %s17
    %p19 = scmp.eq.s32.totalorder %s18, 0
    %s21 = sadd.s32 %s20, 1
    %s22 = scalar_select %p19, %s20, %s21
    %p25 = pneg %p19
    %p26 = scmp.eq.s32.totalorder %s10, 1
    %p27 = por %p25, %p26
    %p28 = scmp.ne.s32.totalorder %s20, %s23
    %p29 = scmp.eq.s32.totalorder %s10, 0
    %p30 = por %p28, %p29
    %p31 = scmp.ne.s32.totalorder %s20, %s23
    %p32 = scmp.eq.s32.totalorder %s15, 1
    %p33 = por %p31, %p32
    %p34 = scmp.ne.s32.totalorder %s23, %s24
    %p35 = scmp.eq.s32.totalorder %s15, 0
    %p36 = por %p34, %p35
    %p37 = scmp.ne.s32.totalorder %s23, %s24
    %p38 = scmp.eq.s32.totalorder %s16, 1
    %p39 = por %p37, %p38
    %p41 = scmp.ne.s32.totalorder %s24, %s40
    %p42 = scmp.eq.s32.totalorder %s16, 0
    %p43 = por %p41, %p42
    %s45 = sadd.s32 %s44, 1
    %p48 = scmp.eq.s32.totalorder %s10, 1
    %p49 = scmp.ne.s32.totalorder %s44, %s46
    %p50 = scmp.eq.s32.totalorder %s10, 0
    %p51 = por %p49, %p50
    %p52 = scmp.ne.s32.totalorder %s44, %s46
    %p53 = scmp.eq.s32.totalorder %s15, 1
    %p54 = por %p52, %p53
    %p55 = scmp.ne.s32.totalorder %s46, %s47
    %p56 = scmp.eq.s32.totalorder %s15, 0
    %p57 = por %p55, %p56
    %p58 = scmp.ne.s32.totalorder %s46, %s47
    %p59 = scmp.eq.s32.totalorder %s16, 1
    %p60 = por %p58, %p59
    %p62 = scmp.ne.s32.totalorder %s47, %s61
    %p63 = scmp.eq.s32.totalorder %s16, 0
    %p64 = por %p62, %p63
    %s66 = sadd.s32 %s65, 1
    %p69 = scmp.eq.s32.totalorder %s10, 1
    %p70 = scmp.ne.s32.totalorder %s65, %s67
    %p71 = scmp.eq.s32.totalorder %s10, 0
    %p72 = por %p70, %p71
    %p73 = scmp.ne.s32.totalorder %s65, %s67
    %p74 = scmp.eq.s32.totalorder %s15, 1
    %p75 = por %p73, %p74
    %p76 = scmp.ne.s32.totalorder %s67, %s68
    %p77 = scmp.eq.s32.totalorder %s15, 0
    %p78 = por %p76, %p77
    %p79 = scmp.ne.s32.totalorder %s67, %s68
    %p80 = scmp.eq.s32.totalorder %s16, 1
    %p81 = por %p79, %p80
    %p83 = scmp.ne.s32.totalorder %s68, %s82
    %p84 = scmp.eq.s32.totalorder %s16, 0
    %p85 = por %p83, %p84
    %s87 = sadd.s32 %s86, 1
    %p90 = scmp.eq.s32.totalorder %s10, 1
    %p91 = scmp.ne.s32.totalorder %s86, %s88
    %p92 = scmp.eq.s32.totalorder %s10, 0
    %p93 = por %p91, %p92
    %p94 = scmp.ne.s32.totalorder %s86, %s88
    %p95 = scmp.eq.s32.totalorder %s15, 1
    %p96 = por %p94, %p95
    %p97 = scmp.ne.s32.totalorder %s88, %s89
    %p98 = scmp.eq.s32.totalorder %s15, 0
    %p99 = por %p97, %p98
    %p100 = scmp.ne.s32.totalorder %s88, %s89
    %p101 = scmp.eq.s32.totalorder %s16, 1
    %p102 = por %p100, %p101
    %p104 = scmp.ne.s32.totalorder %s89, %s103
    %p105 = scmp.eq.s32.totalorder %s16, 0
    %p106 = por %p104, %p105
    %s107 = ssub.s32 %s10, %s17
    %p108 = scmp.eq.s32.totalorder %s107, 0
    %s110 = sadd.s32 %s109, 1
    %s111 = scalar_select %p108, %s109, %s110
    %p114 = pneg %p108
    %p115 = scmp.eq.s32.totalorder %s10, 1
    %p116 = por %p114, %p115
    %p117 = scmp.ne.s32.totalorder %s109, %s112
    %p118 = scmp.eq.s32.totalorder %s10, 0
    %p119 = por %p117, %p118
    %p120 = scmp.ne.s32.totalorder %s109, %s112
    %p121 = scmp.eq.s32.totalorder %s15, 1
    %p122 = por %p120, %p121
    %p123 = scmp.ne.s32.totalorder %s112, %s113
    %p124 = scmp.eq.s32.totalorder %s15, 0
    %p125 = por %p123, %p124
    %p126 = scmp.ne.s32.totalorder %s112, %s113
    %p127 = scmp.eq.s32.totalorder %s16, 1
    %p128 = por %p126, %p127
    %p130 = scmp.ne.s32.totalorder %s113, %s129
    %p131 = scmp.eq.s32.totalorder %s16, 0
    %p132 = por %p130, %p131
    %p133 = scmp.le.s32.totalorder 1, %s10
    %p134 = scmp.lt.s32.totalorder %s10, 3
    %p135 = pnand %p133, %p134
    %p136 = pneg %p135
    // Predicated region
    $region9: #{resnet_block_forward.1} parent=5 // pred_check
      _
    $region10: #{resnet_block_forward.1} parent=5 // pred_check_branch
      %138 = sbr.rel (%p135) target = $region12
    $region11: #{resnet_block_forward.1} parent=5 // pred_region
      %s139 = ssub.s32 %s10, 1
      // Predicated region
      $region13: #{resnet_block_forward.1} parent=11 // pred_check
        %p140 = pneg %p57
      $region14: #{resnet_block_forward.1} parent=11 // pred_check_branch
        %142 = sbr.rel (%p140) target = $region16
      $region15: #{resnet_block_forward.1} parent=11 // pred_region
        _
      $region16: #{resnet_block_forward.1} parent=11 // pred_fallthru
        _
      // Predicated region
      $region17: #{resnet_block_forward.1} parent=11 // pred_check
        %p143 = pneg %p78
      $region18: #{resnet_block_forward.1} parent=11 // pred_check_branch
        %145 = sbr.rel (%p143) target = $region20
      $region19: #{resnet_block_forward.1} parent=11 // pred_region
        _
      $region20: #{resnet_block_forward.1} parent=11 // pred_fallthru
        _
      // Predicated region
      $region21: #{resnet_block_forward.1} parent=11 // pred_check
        %p146 = pneg %p99
      $region22: #{resnet_block_forward.1} parent=11 // pred_check_branch
        %148 = sbr.rel (%p146) target = $region24
      $region23: #{resnet_block_forward.1} parent=11 // pred_region
        _
      $region24: #{resnet_block_forward.1} parent=11 // pred_fallthru
        _
    $region12: #{resnet_block_forward.1} parent=5 // pred_fallthru
      _
    %p149 = scmp.lt.s32.totalorder %s10, 2
    // Predicated region
    $region25: #{resnet_block_forward.1} parent=5 // pred_check
      %p150 = pneg %p149
    $region26: #{resnet_block_forward.1} parent=5 // pred_check_branch
      %152 = sbr.rel (%p150) target = $region28
    $region27: #{resnet_block_forward.1} parent=5 // pred_region
      // Predicated region
      $region29: #{resnet_block_forward.1} parent=27 // pred_check
        %p153 = pneg %p30
      $region30: #{resnet_block_forward.1} parent=27 // pred_check_branch
        %155 = sbr.rel (%p153) target = $region32
      $region31: #{resnet_block_forward.1} parent=27 // pred_region
        %p156 = scmp.lt.s32.totalorder %s10, 1
        %s157 = scalar_select %p156, %s10, 1
        %s158 = smul.addr %s157, 2
        %s159 = smul.addr %s158, 4
        %s160 = scalar_lea.vmem %s0, %s159
      $region32: #{resnet_block_forward.1} parent=27 // pred_fallthru
        _
    $region28: #{resnet_block_forward.1} parent=5 // pred_fallthru
      _
    %p161 = scmp.le.s32.totalorder 1, %s10
    %p162 = scmp.lt.s32.totalorder %s10, 3
    %p163 = pnand %p161, %p162
    %p164 = pneg %p163
    // Predicated region
    $region33: #{resnet_block_forward.1} parent=5 // pred_check
      _
    $region34: #{resnet_block_forward.1} parent=5 // pred_check_branch
      %166 = sbr.rel (%p163) target = $region36
    $region35: #{resnet_block_forward.1} parent=5 // pred_region
      %s167 = ssub.s32 %s10, 1
      %p168 = scmp.lt.s32.totalorder %s15, 1
      %s169 = scalar_select %p168, %s15, 1
      %s170 = smul.addr %s169, 2
      %s171 = smul.addr %s170, 4
      %s172 = scalar_lea.vmem %s0, %s171
      %p173 = pneg %p36
      %p174 = pneg %p33
      %p175 = pneg %p57
      %p176 = pneg %p54
      %p177 = pneg %p78
      %p178 = pneg %p75
      %p179 = pneg %p99
      %p180 = pneg %p96
      %p181 = pneg %p125
      %p182 = pneg %p122
      %p183 = scmp.lt.s32.totalorder %s15, 1
      %s184 = scalar_select %p183, %s15, 1
      %s185 = smul.addr %s184, 2
      %s186 = smul.addr %s185, 8
      %s187 = scalar_lea.vmem %s4, %s186
      %p188 = scmp.lt.s32.totalorder %s15, 1
      %s189 = scalar_select %p188, %s15, 1
      %s190 = smul.addr %s189, 2
      %s191 = smul.addr %s190, 4
      %s192 = scalar_lea.vmem %s0, %s191
      %p193 = scmp.lt.s32.totalorder %s15, 1
      %s194 = scalar_select %p193, %s15, 1
      %s195 = smul.addr %s194, 2
      %s196 = smul.addr %s195, 8
      %s197 = scalar_lea.vmem %s4, %s196
      %v199 = vld [vmem:[%s192] sm:$0xff]
      %v201 = vcombine.high %v199, %v199
      %203 = vrot.lane.b32.xlu0 %v199, 17
      %v204 = vpop.permute.xlu0 %203
      %205 = vrot.lane.b32.xlu0 %v201, 17
      %v206 = vpop.permute.xlu0 %205
      %v207 = vlaneseq
      %v208 = vand.u32 %v207, 127
      %vm209 = vcmp.lt.s32.totalorder %v208, 17
      %v210 = vsel %vm209, %v204, %v206
      %v211 = vsel %vm209, %v206, %v204
      %v212 = vld [vmem:[%s3] ss:$8 sm:$0x3]
      %v214 = vlaneseq
      %v215 = vshrl.u32 %v214, 7
      %v216 = vsub.s32 0, %v215
      %v217 = vrot.slane %v212, %v216
      %v218 = vlaneseq
      %v219 = vshrl.u32 %v218, 7
      %v220 = vsub.s32 1, %v219
      %v221 = vrot.slane %v212, %v220
      %v224 = vmul.f32 %v211, %v217
      %v225 = vmul.f32 %v210, %v221
      %226 = vst [vmem:[#allocation2] sm:$0xf] %v224
      %227 = vst [vmem:[#allocation2 + $0x8] sm:$0xf] %v225
      %228 = vrot.lane.b32.xlu0 %v199, 16
      %v229 = vpop.permute.xlu0 %228
      %230 = vrot.lane.b32.xlu0 %v201, 16
      %v231 = vpop.permute.xlu0 %230
      %vm232 = vcmp.lt.s32.totalorder %v208, 16
      %v233 = vsel %vm232, %v229, %v231
      %v234 = vsel %vm232, %v231, %v229
      %s235 = scalar_lea.vmem %s3, 1
      %v236 = vld [vmem:[%s235] ss:$8 sm:$0x3]
      %v238 = vlaneseq
      %v239 = vshrl.u32 %v238, 7
      %v240 = vsub.s32 0, %v239
      %v241 = vrot.slane %v236, %v240
      %v242 = vlaneseq
      %v243 = vshrl.u32 %v242, 7
      %v244 = vsub.s32 1, %v243
      %v245 = vrot.slane %v236, %v244
      %v248 = vmul.f32 %v234, %v241
      %v249 = vmul.f32 %v233, %v245
      %v252 = vrot.slane %v248, 4
      %v253 = vrot.slane %v249, 4
      %256 = vst [vmem:[#allocation2] sm:$0xf0] %v252
      %257 = vst [vmem:[#allocation2 + $0x8] sm:$0xf0] %v253
      %258 = vrot.lane.b32.xlu0 %v199, 15
      %v259 = vpop.permute.xlu0 %258
      %260 = vrot.lane.b32.xlu0 %v201, 15
      %v261 = vpop.permute.xlu0 %260
      %vm262 = vcmp.lt.s32.totalorder %v208, 15
      %v263 = vsel %vm262, %v259, %v261
      %v264 = vsel %vm262, %v261, %v259
      %s265 = scalar_lea.vmem %s3, 2
      %v266 = vld [vmem:[%s265] ss:$8 sm:$0x3]
      %v268 = vlaneseq
      %v269 = vshrl.u32 %v268, 7
      %v270 = vsub.s32 0, %v269
      %v271 = vrot.slane %v266, %v270
      %v272 = vlaneseq
      %v273 = vshrl.u32 %v272, 7
      %v274 = vsub.s32 1, %v273
      %v275 = vrot.slane %v266, %v274
      %v278 = vmul.f32 %v264, %v271
      %v279 = vmul.f32 %v263, %v275
      %280 = vst [vmem:[#allocation2 + $0x10] sm:$0xf] %v278
      %281 = vst [vmem:[#allocation2 + $0x18] sm:$0xf] %v279
      %282 = vrot.lane.b32.xlu0 %v199, 1
      %v283 = vpop.permute.xlu0 %282
      %284 = vrot.lane.b32.xlu0 %v201, 1
      %v285 = vpop.permute.xlu0 %284
      %vm286 = vcmp.lt.s32.totalorder %v208, 1
      %v287 = vsel %vm286, %v283, %v285
      %v288 = vsel %vm286, %v285, %v283
      %s289 = scalar_lea.vmem %s3, 3
      %v290 = vld [vmem:[%s289] ss:$8 sm:$0x3]
      %v292 = vlaneseq
      %v293 = vshrl.u32 %v292, 7
      %v294 = vsub.s32 0, %v293
      %v295 = vrot.slane %v290, %v294
      %v296 = vlaneseq
      %v297 = vshrl.u32 %v296, 7
      %v298 = vsub.s32 1, %v297
      %v299 = vrot.slane %v290, %v298
      %v302 = vmul.f32 %v288, %v295
      %v303 = vmul.f32 %v287, %v299
      %v306 = vrot.slane %v302, 4
      %v307 = vrot.slane %v303, 4
      %310 = vst [vmem:[#allocation2 + $0x10] sm:$0xf0] %v306
      %311 = vst [vmem:[#allocation2 + $0x18] sm:$0xf0] %v307
      %312 = vst [vmem:[#allocation2 + $0x20] sm:$0xf] %v199
      %313 = vst [vmem:[#allocation2 + $0x28] sm:$0xf] %v201
      %314 = vrot.lane.b32.xlu0 %v199, 127
      %v315 = vpop.permute.xlu0 %314
      %316 = vrot.lane.b32.xlu0 %v201, 127
      %v317 = vpop.permute.xlu0 %316
      %vm318 = vcmp.lt.s32.totalorder %v208, 127
      %v319 = vsel %vm318, %v315, %v317
      %v320 = vsel %vm318, %v317, %v315
      %s321 = scalar_lea.vmem %s3, 5
      %v322 = vld [vmem:[%s321] ss:$8 sm:$0x3]
      %v324 = vlaneseq
      %v325 = vshrl.u32 %v324, 7
      %v326 = vsub.s32 0, %v325
      %v327 = vrot.slane %v322, %v326
      %v328 = vlaneseq
      %v329 = vshrl.u32 %v328, 7
      %v330 = vsub.s32 1, %v329
      %v331 = vrot.slane %v322, %v330
      %v334 = vmul.f32 %v319, %v327
      %v335 = vmul.f32 %v320, %v331
      %v338 = vrot.slane %v334, 4
      %v339 = vrot.slane %v335, 4
      %342 = vst [vmem:[#allocation2 + $0x20] sm:$0xf0] %v338
      %343 = vst [vmem:[#allocation2 + $0x28] sm:$0xf0] %v339
      %344 = vrot.lane.b32.xlu0 %v199, 113
      %v345 = vpop.permute.xlu0 %344
      %346 = vrot.lane.b32.xlu0 %v201, 113
      %v347 = vpop.permute.xlu0 %346
      %vm348 = vcmp.lt.s32.totalorder %v208, 113
      %v349 = vsel %vm348, %v345, %v347
      %v350 = vsel %vm348, %v347, %v345
      %s351 = scalar_lea.vmem %s3, 6
      %v352 = vld [vmem:[%s351] ss:$8 sm:$0x3]
      %v354 = vlaneseq
      %v355 = vshrl.u32 %v354, 7
      %v356 = vsub.s32 0, %v355
      %v357 = vrot.slane %v352, %v356
      %v358 = vlaneseq
      %v359 = vshrl.u32 %v358, 7
      %v360 = vsub.s32 1, %v359
      %v361 = vrot.slane %v352, %v360
      %v364 = vmul.f32 %v349, %v357
      %v365 = vmul.f32 %v350, %v361
      %366 = vst [vmem:[#allocation2 + $0x30] sm:$0xf] %v364
      %367 = vst [vmem:[#allocation2 + $0x38] sm:$0xf] %v365
      %368 = vrot.lane.b32.xlu0 %v199, 112
      %v369 = vpop.permute.xlu0 %368
      %370 = vrot.lane.b32.xlu0 %v201, 112
      %v371 = vpop.permute.xlu0 %370
      %vm372 = vcmp.lt.s32.totalorder %v208, 112
      %v373 = vsel %vm372, %v369, %v371
      %v374 = vsel %vm372, %v371, %v369
      %s375 = scalar_lea.vmem %s3, 7
      %v376 = vld [vmem:[%s375] ss:$8 sm:$0x3]
      %v378 = vlaneseq
      %v379 = vshrl.u32 %v378, 7
      %v380 = vsub.s32 0, %v379
      %v381 = vrot.slane %v376, %v380
      %v382 = vlaneseq
      %v383 = vshrl.u32 %v382, 7
      %v384 = vsub.s32 1, %v383
      %v385 = vrot.slane %v376, %v384
      %v388 = vmul.f32 %v373, %v381
      %v389 = vmul.f32 %v374, %v385
      %v392 = vrot.slane %v388, 4
      %v393 = vrot.slane %v389, 4
      %396 = vst [vmem:[#allocation2 + $0x30] sm:$0xf0] %v392
      %397 = vst [vmem:[#allocation2 + $0x38] sm:$0xf0] %v393
      %398 = vrot.lane.b32.xlu0 %v199, 111
      %v399 = vpop.permute.xlu0 %398
      %400 = vrot.lane.b32.xlu0 %v201, 111
      %v401 = vpop.permute.xlu0 %400
      %vm402 = vcmp.lt.s32.totalorder %v208, 111
      %v403 = vsel %vm402, %v399, %v401
      %v404 = vsel %vm402, %v401, %v399
      %s405 = scalar_lea.vmem %s3, 16
      %v406 = vld [vmem:[%s405] ss:$8 sm:$0x3]
      %v408 = vlaneseq
      %v409 = vshrl.u32 %v408, 7
      %v410 = vsub.s32 0, %v409
      %v411 = vrot.slane %v406, %v410
      %v412 = vlaneseq
      %v413 = vshrl.u32 %v412, 7
      %v414 = vsub.s32 1, %v413
      %v415 = vrot.slane %v406, %v414
      %v418 = vmul.f32 %v403, %v411
      %v419 = vmul.f32 %v404, %v415
      %420 = vst [vmem:[#allocation2 + $0x40] sm:$0xf] %v418
      %421 = vst [vmem:[#allocation2 + $0x48] sm:$0xf] %v419
      %v422 = vld [vmem:[%s1] sm:$0xf]
      %v423 = vld [vmem:[%s1 + $0x4] sm:$0xf]
      %v424 = vld [vmem:[#allocation2] sm:$0xff]
      %v425 = vld [vmem:[#allocation2 + $0x8] sm:$0xff]
      %v426 = vld [vmem:[#allocation2 + $0x10] sm:$0xff]
      %v427 = vld [vmem:[#allocation2 + $0x18] sm:$0xff]
      %v428 = vld [vmem:[#allocation2 + $0x20] sm:$0xff]
      %v429 = vld [vmem:[#allocation2 + $0x28] sm:$0xff]
      %v430 = vld [vmem:[#allocation2 + $0x30] sm:$0xff]
      %v431 = vld [vmem:[#allocation2 + $0x38] sm:$0xff]
      %v432 = vld [vmem:[#allocation2 + $0x40] sm:$0xf]
      %v433 = vld [vmem:[#allocation2 + $0x48] sm:$0xf]
      %v434 = vpack.c.bf16 %v426, %v424
      %v435 = vpack.c.bf16 %v427, %v425
      %v436 = vpack.c.bf16 %v430, %v428
      %v437 = vpack.c.bf16 %v431, %v429
      %v438 = vpack.c.bf16 %v432, %v432
      %v439 = vpack.c.bf16 %v433, %v433
      %v442 = vunpack.c.l.b16 %v422
      %v443 = vunpack.c.l.b16 %v423
      %v444 = vpack.c.b16 %v443, %v442
      %vm445 = vcmask 293888
      %v447 = vsel %vm445, %v444, 0
      %vm449 = vcmask 1041408
      %v451 = vsel %vm449, %v438, 0
      %v454 = vsel %vm449, %v439, 0
      %456 = vmatprep.subr.bf16.mxu0 %v435
      %457 = vmatpush1.bf16.msra.mxu0 %v434
      %458 = vmatprep.subr.bf16.mxu0 %v437
      %459 = vmatpush1.bf16.msra.mxu0 %v436
      %460 = vmatprep.subr.bf16.mxu0 %v454
      %461 = vmatpush1.bf16.msra.mxu0 %v451
      %462 = vmatprep.subr.bf16.mxu0 0
      %463 = vmatpush1.bf16.msra.mxu0 0
      %464 = vmatprep.subr.bf16.mxu0 0
      %465 = vmatpush1.bf16.msra.mxu0 0
      %466 = vmatprep.subr.bf16.mxu0 0
      %467 = vmatpush1.bf16.msra.mxu0 0
      %468 = vmatprep.subr.bf16.mxu0 0
      %469 = vmatpush1.bf16.msra.mxu0 0
      %470 = vmatprep.subr.bf16.mxu0 0
      %471 = vmatpush1.bf16.msra.mxu0 0
      %472 = vmatprep.subr.bf16.mxu0 0
      %473 = vmatpush1.bf16.msra.mxu0 0
      %474 = vmatprep.subr.bf16.mxu0 0
      %475 = vmatpush1.bf16.msra.mxu0 0
      %476 = vmatprep.subr.bf16.mxu0 0
      %477 = vmatpush1.bf16.msra.mxu0 0
      %478 = vmatprep.subr.bf16.mxu0 0
      %479 = vmatpush1.bf16.msra.mxu0 0
      %480 = vmatprep.subr.bf16.mxu0 0
      %481 = vmatpush1.bf16.msra.mxu0 0
      %482 = vmatprep.subr.bf16.mxu0 0
      %483 = vmatpush1.bf16.msra.mxu0 0
      %484 = vmatprep.subr.bf16.mxu0 0
      %485 = vmatpush1.bf16.msra.mxu0 0
      %486 = vmatprep.subr.bf16.mxu0 0
      %487 = vmatpush1.bf16.msra.mxu0 0
      %488 = vmatprep.mubr.bf16.mxu0 0
      %489 = vmatmul.mubr.bf16.gmra.mrb[0].mxu0 %v447
      %v490 = vpop.f32.mrb[0].mxu0
      %v491 = vadd.f32 0.0, %v490
      %v492 = vpop.f32.mrb[0].mxu0
      %v493 = vadd.f32 0.0, %v492
      %v494 = vpop.f32.mrb[0].mxu0
      %v495 = vadd.f32 0.0, %v494
      %v496 = vpop.f32.mrb[0].mxu0
      %v497 = vadd.f32 0.0, %v496
      %498 = vdwg.mxu0
      %499 = vst [vmem:[#allocation4] sm:$0xff] %v491
      %500 = vst [vmem:[#allocation4 + $0x8] sm:$0xff] %v493
      %501 = vst [vmem:[#allocation4 + $0x10] sm:$0xff] %v495
      %502 = vst [vmem:[#allocation4 + $0x18] sm:$0xff] %v497
      %v503 = vld [vmem:[#allocation4] sm:$0xff]
      %v504 = vld [vmem:[#allocation4 + $0x8] sm:$0xff]
      %vm505 = vcmp.gt.f32.partialorder %v503, 0.0
      %vm506 = vcmp.gt.f32.partialorder %v504, 0.0
      %v507 = vmul.f32 %v503, 0.1
      %v508 = vmul.f32 %v504, 0.1
      %v509 = vsel %vm505, %v503, %v507
      %v510 = vsel %vm506, %v504, %v508
      %v511 = vld [vmem:[#allocation4 + $0x10] sm:$0xff]
      %v512 = vld [vmem:[#allocation4 + $0x18] sm:$0xff]
      %513 = vrot.lane.b32.xlu0 %v509, 17
      %v514 = vpop.permute.xlu0 %513
      %515 = vrot.lane.b32.xlu0 %v510, 17
      %v516 = vpop.permute.xlu0 %515
      %v517 = vsel %vm209, %v514, %v516
      %v518 = vsel %vm209, %v516, %v514
      %v519 = vld [vmem:[%s3] ss:$8 sm:$0x3]
      %v521 = vlaneseq
      %v522 = vshrl.u32 %v521, 7
      %v523 = vsub.s32 0, %v522
      %v524 = vrot.slane %v519, %v523
      %v525 = vlaneseq
      %v526 = vshrl.u32 %v525, 7
      %v527 = vsub.s32 1, %v526
      %v528 = vrot.slane %v519, %v527
      %v531 = vmul.f32 %v518, %v524
      %v532 = vmul.f32 %v517, %v528
      %533 = vst [vmem:[#allocation3] sm:$0xff] %v531
      %534 = vst [vmem:[#allocation3 + $0x8] sm:$0xff] %v532
      %535 = vrot.lane.b32.xlu0 %v509, 16
      %v536 = vpop.permute.xlu0 %535
      %537 = vrot.lane.b32.xlu0 %v510, 16
      %v538 = vpop.permute.xlu0 %537
      %v539 = vsel %vm232, %v536, %v538
      %v540 = vsel %vm232, %v538, %v536
      %v541 = vld [vmem:[%s235] ss:$8 sm:$0x3]
      %v543 = vlaneseq
      %v544 = vshrl.u32 %v543, 7
      %v545 = vsub.s32 0, %v544
      %v546 = vrot.slane %v541, %v545
      %v547 = vlaneseq
      %v548 = vshrl.u32 %v547, 7
      %v549 = vsub.s32 1, %v548
      %v550 = vrot.slane %v541, %v549
      %v553 = vmul.f32 %v540, %v546
      %v554 = vmul.f32 %v539, %v550
      %555 = vst [vmem:[#allocation3 + $0x10] sm:$0xff] %v553
      %556 = vst [vmem:[#allocation3 + $0x18] sm:$0xff] %v554
      %557 = vrot.lane.b32.xlu0 %v509, 15
      %v558 = vpop.permute.xlu0 %557
      %559 = vrot.lane.b32.xlu0 %v510, 15
      %v560 = vpop.permute.xlu0 %559
      %v561 = vsel %vm262, %v558, %v560
      %v562 = vsel %vm262, %v560, %v558
      %v563 = vld [vmem:[%s265] ss:$8 sm:$0x3]
      %v565 = vlaneseq
      %v566 = vshrl.u32 %v565, 7
      %v567 = vsub.s32 0, %v566
      %v568 = vrot.slane %v563, %v567
      %v569 = vlaneseq
      %v570 = vshrl.u32 %v569, 7
      %v571 = vsub.s32 1, %v570
      %v572 = vrot.slane %v563, %v571
      %v575 = vmul.f32 %v562, %v568
      %v576 = vmul.f32 %v561, %v572
      %577 = vst [vmem:[#allocation3 + $0x20] sm:$0xff] %v575
      %578 = vst [vmem:[#allocation3 + $0x28] sm:$0xff] %v576
      %579 = vrot.lane.b32.xlu0 %v509, 1
      %v580 = vpop.permute.xlu0 %579
      %581 = vrot.lane.b32.xlu0 %v510, 1
      %v582 = vpop.permute.xlu0 %581
      %v583 = vsel %vm286, %v580, %v582
      %v584 = vsel %vm286, %v582, %v580
      %v585 = vld [vmem:[%s289] ss:$8 sm:$0x3]
      %v587 = vlaneseq
      %v588 = vshrl.u32 %v587, 7
      %v589 = vsub.s32 0, %v588
      %v590 = vrot.slane %v585, %v589
      %v591 = vlaneseq
      %v592 = vshrl.u32 %v591, 7
      %v593 = vsub.s32 1, %v592
      %v594 = vrot.slane %v585, %v593
      %v597 = vmul.f32 %v584, %v590
      %v598 = vmul.f32 %v583, %v594
      %599 = vst [vmem:[#allocation3 + $0x30] sm:$0xff] %v597
      %600 = vst [vmem:[#allocation3 + $0x38] sm:$0xff] %v598
      %601 = vst [vmem:[#allocation3 + $0x40] sm:$0xff] %v509
      %602 = vst [vmem:[#allocation3 + $0x48] sm:$0xff] %v510
      %603 = vrot.lane.b32.xlu0 %v509, 127
      %v604 = vpop.permute.xlu0 %603
      %605 = vrot.lane.b32.xlu0 %v510, 127
      %v606 = vpop.permute.xlu0 %605
      %v607 = vsel %vm318, %v604, %v606
      %v608 = vsel %vm318, %v606, %v604
      %v609 = vld [vmem:[%s321] ss:$8 sm:$0x3]
      %v611 = vlaneseq
      %v612 = vshrl.u32 %v611, 7
      %v613 = vsub.s32 0, %v612
      %v614 = vrot.slane %v609, %v613
      %v615 = vlaneseq
      %v616 = vshrl.u32 %v615, 7
      %v617 = vsub.s32 1, %v616
      %v618 = vrot.slane %v609, %v617
      %v621 = vmul.f32 %v607, %v614
      %v622 = vmul.f32 %v608, %v618
      %623 = vst [vmem:[#allocation3 + $0x50] sm:$0xff] %v621
      %624 = vst [vmem:[#allocation3 + $0x58] sm:$0xff] %v622
      %625 = vrot.lane.b32.xlu0 %v509, 113
      %v626 = vpop.permute.xlu0 %625
      %627 = vrot.lane.b32.xlu0 %v510, 113
      %v628 = vpop.permute.xlu0 %627
      %v629 = vsel %vm348, %v626, %v628
      %v630 = vsel %vm348, %v628, %v626
      %v631 = vld [vmem:[%s351] ss:$8 sm:$0x3]
      %v633 = vlaneseq
      %v634 = vshrl.u32 %v633, 7
      %v635 = vsub.s32 0, %v634
      %v636 = vrot.slane %v631, %v635
      %v637 = vlaneseq
      %v638 = vshrl.u32 %v637, 7
      %v639 = vsub.s32 1, %v638
      %v640 = vrot.slane %v631, %v639
      %v643 = vmul.f32 %v629, %v636
      %v644 = vmul.f32 %v630, %v640
      %645 = vst [vmem:[#allocation3 + $0x60] sm:$0xff] %v643
      %646 = vst [vmem:[#allocation3 + $0x68] sm:$0xff] %v644
      %647 = vrot.lane.b32.xlu0 %v509, 112
      %v648 = vpop.permute.xlu0 %647
      %649 = vrot.lane.b32.xlu0 %v510, 112
      %v650 = vpop.permute.xlu0 %649
      %v651 = vsel %vm372, %v648, %v650
      %v652 = vsel %vm372, %v650, %v648
      %v653 = vld [vmem:[%s375] ss:$8 sm:$0x3]
      %v655 = vlaneseq
      %v656 = vshrl.u32 %v655, 7
      %v657 = vsub.s32 0, %v656
      %v658 = vrot.slane %v653, %v657
      %v659 = vlaneseq
      %v660 = vshrl.u32 %v659, 7
      %v661 = vsub.s32 1, %v660
      %v662 = vrot.slane %v653, %v661
      %v665 = vmul.f32 %v651, %v658
      %v666 = vmul.f32 %v652, %v662
      %667 = vst [vmem:[#allocation3 + $0x70] sm:$0xff] %v665
      %668 = vst [vmem:[#allocation3 + $0x78] sm:$0xff] %v666
      %669 = vrot.lane.b32.xlu0 %v509, 111
      %v670 = vpop.permute.xlu0 %669
      %671 = vrot.lane.b32.xlu0 %v510, 111
      %v672 = vpop.permute.xlu0 %671
      %v673 = vsel %vm402, %v670, %v672
      %v674 = vsel %vm402, %v672, %v670
      %v675 = vld [vmem:[%s405] ss:$8 sm:$0x3]
      %v677 = vlaneseq
      %v678 = vshrl.u32 %v677, 7
      %v679 = vsub.s32 0, %v678
      %v680 = vrot.slane %v675, %v679
      %v681 = vlaneseq
      %v682 = vshrl.u32 %v681, 7
      %v683 = vsub.s32 1, %v682
      %v684 = vrot.slane %v675, %v683
      %v687 = vmul.f32 %v673, %v680
      %v688 = vmul.f32 %v674, %v684
      %689 = vst [vmem:[#allocation3 + $0x80] sm:$0xff] %v687
      %690 = vst [vmem:[#allocation3 + $0x88] sm:$0xff] %v688
      %v691 = vld [vmem:[%s2] sm:$0xf]
      %v692 = vld [vmem:[#allocation3] sm:$0xff]
      %v693 = vld [vmem:[#allocation3 + $0x8] sm:$0xff]
      %v694 = vld [vmem:[#allocation3 + $0x10] sm:$0xff]
      %v695 = vld [vmem:[#allocation3 + $0x18] sm:$0xff]
      %v696 = vld [vmem:[#allocation3 + $0x20] sm:$0xff]
      %v697 = vld [vmem:[#allocation3 + $0x28] sm:$0xff]
      %v698 = vld [vmem:[#allocation3 + $0x30] sm:$0xff]
      %v699 = vld [vmem:[#allocation3 + $0x38] sm:$0xff]
      %v700 = vld [vmem:[#allocation3 + $0x40] sm:$0xff]
      %v701 = vld [vmem:[#allocation3 + $0x48] sm:$0xff]
      %v702 = vld [vmem:[#allocation3 + $0x50] sm:$0xff]
      %v703 = vld [vmem:[#allocation3 + $0x58] sm:$0xff]
      %v704 = vld [vmem:[#allocation3 + $0x60] sm:$0xff]
      %v705 = vld [vmem:[#allocation3 + $0x68] sm:$0xff]
      %v706 = vld [vmem:[#allocation3 + $0x70] sm:$0xff]
      %v707 = vld [vmem:[#allocation3 + $0x78] sm:$0xff]
      %v708 = vld [vmem:[#allocation3 + $0x80] sm:$0xff]
      %v709 = vld [vmem:[#allocation3 + $0x88] sm:$0xff]
      %v710 = vpack.c.bf16 %v694, %v692
      %v711 = vpack.c.bf16 %v695, %v693
      %v712 = vpack.c.bf16 %v698, %v696
      %v713 = vpack.c.bf16 %v699, %v697
      %v714 = vpack.c.bf16 %v702, %v700
      %v715 = vpack.c.bf16 %v703, %v701
      %v716 = vpack.c.bf16 %v706, %v704
      %v717 = vpack.c.bf16 %v707, %v705
      %v718 = vpack.c.bf16 %v708, %v708
      %v719 = vpack.c.bf16 %v709, %v709
      %vm720 = vcmask 588800
      %v722 = vsel %vm720, %v691, 0
      %vm724 = vcmask 1043456
      %v726 = vsel %vm724, %v718, 0
      %v729 = vsel %vm724, %v719, 0
      %731 = vmatprep.subr.bf16.mxu0 %v711
      %732 = vmatpush1.bf16.msra.mxu0 %v710
      %733 = vmatprep.subr.bf16.mxu0 %v713
      %734 = vmatpush1.bf16.msra.mxu0 %v712
      %735 = vmatprep.subr.bf16.mxu0 %v715
      %736 = vmatpush1.bf16.msra.mxu0 %v714
      %737 = vmatprep.subr.bf16.mxu0 %v717
      %738 = vmatpush1.bf16.msra.mxu0 %v716
      %739 = vmatprep.subr.bf16.mxu0 %v729
      %740 = vmatpush1.bf16.msra.mxu0 %v726
      %741 = vmatprep.subr.bf16.mxu0 0
      %742 = vmatpush1.bf16.msra.mxu0 0
      %743 = vmatprep.subr.bf16.mxu0 0
      %744 = vmatpush1.bf16.msra.mxu0 0
      %745 = vmatprep.subr.bf16.mxu0 0
      %746 = vmatpush1.bf16.msra.mxu0 0
      %747 = vmatprep.subr.bf16.mxu0 0
      %748 = vmatpush1.bf16.msra.mxu0 0
      %749 = vmatprep.subr.bf16.mxu0 0
      %750 = vmatpush1.bf16.msra.mxu0 0
      %751 = vmatprep.subr.bf16.mxu0 0
      %752 = vmatpush1.bf16.msra.mxu0 0
      %753 = vmatprep.subr.bf16.mxu0 0
      %754 = vmatpush1.bf16.msra.mxu0 0
      %755 = vmatprep.subr.bf16.mxu0 0
      %756 = vmatpush1.bf16.msra.mxu0 0
      %757 = vmatprep.subr.bf16.mxu0 0
      %758 = vmatpush1.bf16.msra.mxu0 0
      %759 = vmatprep.subr.bf16.mxu0 0
      %760 = vmatpush1.bf16.msra.mxu0 0
      %761 = vmatprep.subr.bf16.mxu0 0
      %762 = vmatpush1.bf16.msra.mxu0 0
      %763 = vmatprep.mubr.bf16.mxu0 0
      %764 = vmatmul.mubr.bf16.gmra.mrb[0].mxu0 %v722
      %v765 = vpop.f32.mrb[0].mxu0
      %v766 = vadd.f32 %v511, %v765
      %v767 = vpop.f32.mrb[0].mxu0
      %v768 = vadd.f32 %v512, %v767
      %v769 = vpop.f32.mrb[0].mxu0
      %v770 = vpop.f32.mrb[0].mxu0
      %771 = vdwg.mxu0
      %vm772 = vcmp.gt.f32.partialorder %v766, 0.0
      %vm773 = vcmp.gt.f32.partialorder %v768, 0.0
      %v774 = vmul.f32 %v766, 0.1
      %v775 = vmul.f32 %v768, 0.1
      %v776 = vsel %vm772, %v766, %v774
      %v777 = vsel %vm773, %v768, %v775
      %778 = vst [vmem:[%s197] sm:$0xff] %v776
      %779 = vst [vmem:[%s197 + $0x8] sm:$0xff] %v777
      %p780 = scmp.lt.s32.totalorder %s15, 1
      %s781 = scalar_select %p780, %s15, 1
      %s782 = smul.addr %s781, 2
      %s783 = smul.addr %s782, 8
      %s784 = scalar_lea.vmem %s4, %s783
      // Predicated region
      $region37: #{resnet_block_forward.1} parent=35 // pred_check
        %p785 = pneg %p122
      $region38: #{resnet_block_forward.1} parent=35 // pred_check_branch
        %787 = sbr.rel (%p785) target = $region40
      $region39: #{resnet_block_forward.1} parent=35 // pred_region
        _
      $region40: #{resnet_block_forward.1} parent=35 // pred_fallthru
        _
    $region36: #{resnet_block_forward.1} parent=5 // pred_fallthru
      _
    %p788 = scmp.le.s32.totalorder 2, %s10
    // Predicated region
    $region41: #{resnet_block_forward.1} parent=5 // pred_check
      %p789 = pneg %p788
    $region42: #{resnet_block_forward.1} parent=5 // pred_check_branch
      %791 = sbr.rel (%p789) target = $region44
    $region43: #{resnet_block_forward.1} parent=5 // pred_region
      %s792 = ssub.s32 %s10, 2
      // Predicated region
      $region45: #{resnet_block_forward.1} parent=43 // pred_check
        %p793 = pneg %p128
      $region46: #{resnet_block_forward.1} parent=43 // pred_check_branch
        %795 = sbr.rel (%p793) target = $region48
      $region47: #{resnet_block_forward.1} parent=43 // pred_region
        %p796 = scmp.lt.s32.totalorder %s16, 1
        %s797 = scalar_select %p796, %s16, 1
        %s798 = smul.addr %s797, 2
        %s799 = smul.addr %s798, 8
        %s800 = scalar_lea.vmem %s4, %s799
      $region48: #{resnet_block_forward.1} parent=43 // pred_fallthru
        _
    $region44: #{resnet_block_forward.1} parent=5 // pred_fallthru
      _
  $region6: #{resnet_block_forward.1} parent=0 // loop_footer
    %s14 = sadd.s32 1, %s10
  $region7: #{resnet_block_forward.1} parent=0 // loop_footer_branch
    %9 = sbr.rel target = $region3
  $region8: #{resnet_block_forward.1} parent=0 // loop_exit
    _

</llo_original>
